<compile_context>
chip_gen: v5e
topology: v5e:2x2
jax: 0.10.0
libtpu: 0.0.40
codegen_flags: <defaults>
</compile_context>

<pallas_src>
import math
import functools

import jax
import jax.numpy as jnp
from jax.experimental import pallas as pl
from jax.experimental.pallas import tpu as pltpu

LANES = 128
MAX_TILE_ROWS = 2048  # 2048 x 128 x 4B = 1 MiB per input block (v5e-safe)


def _nmse_kernel(yt_ref, yp_ref, o_ref, *, epsilon, total_rows, tile_rows,
                 needs_mask):
    yt = yt_ref[...].astype(jnp.float32)
    yp = yp_ref[...].astype(jnp.float32)

    diff = yt - yp
    # diff^2 / (yt^2 + eps) with the reciprocal routed off the VALU.
    per_elem = (diff * diff) * pl.reciprocal(yt * yt + epsilon, approx=False)

    if needs_mask:
        # Last block may read past the real rows; zero out those rows.
        row0 = pl.program_id(0) * tile_rows
        row_idx = jax.lax.broadcasted_iota(jnp.int32, per_elem.shape, 0)
        valid = (row0 + row_idx) < total_rows
        per_elem = jnp.where(valid, per_elem, 0.0)

    # Per-block partial sum kept vreg-shaped (8, 128): pure VPU adds, no
    # cross-lane/sublane reduction inside the kernel.
    partial = per_elem.reshape(tile_rows // 8, 8, LANES).sum(axis=0)
    o_ref[...] = partial[None]


def elementwise_normalized_mse_loss(y_true, y_pred, epsilon=1e-8):
    assert y_true.shape == y_pred.shape
    n_elem = math.prod(y_true.shape)

    yt = jnp.ravel(y_true)
    yp = jnp.ravel(y_pred)

    # Pad only to a multiple of one (8,128) tile so the 2D reshape is legal.
    # Zero padding contributes 0 to the sum: (0-0)^2 / (0^2+eps) == 0.
    # No copy at all when n_elem % 1024 == 0 (the common case).
    min_block = 8 * LANES
    padded = pl.cdiv(n_elem, min_block) * min_block
    if padded != n_elem:
        yt = jnp.pad(yt, (0, padded - n_elem))
        yp = jnp.pad(yp, (0, padded - n_elem))

    rows = padded // LANES
    tile_rows = min(MAX_TILE_ROWS, rows)       # both are multiples of 8
    grid = pl.cdiv(rows, tile_rows)
    needs_mask = (rows % tile_rows) != 0       # only the ragged-tail case

    yt2d = yt.reshape(rows, LANES)
    yp2d = yp.reshape(rows, LANES)

    kernel = functools.partial(
        _nmse_kernel,
        epsilon=float(epsilon),
        total_rows=rows,
        tile_rows=tile_rows,
        needs_mask=needs_mask,
    )

    in_bytes = 2 * padded * yt2d.dtype.itemsize
    out_bytes = grid * 8 * LANES * 4
    cost = pl.CostEstimate(
        flops=6 * padded,
        transcendentals=padded,        # one reciprocal per element
        bytes_accessed=in_bytes + out_bytes,
    )

    partials = pl.pallas_call(
        kernel,
        out_shape=jax.ShapeDtypeStruct((grid, 8, LANES), jnp.float32),
        grid_spec=pltpu.PrefetchScalarGridSpec(
            num_scalar_prefetch=0,
            grid=(grid,),
            in_specs=[
                pl.BlockSpec((tile_rows, LANES), lambda i: (i, 0)),
                pl.BlockSpec((tile_rows, LANES), lambda i: (i, 0)),
            ],
            out_specs=pl.BlockSpec((1, 8, LANES), lambda i: (i, 0, 0)),
        ),
        compiler_params=pltpu.CompilerParams(
            dimension_semantics=("parallel",),
        ),
        cost_estimate=cost,
    )(yt2d, yp2d)

    # Tiny final reduction + mean over the ORIGINAL element count.
    return jnp.sum(partials) / n_elem


def _reference(y_true, y_pred, epsilon=1e-8):
    yt = y_true.astype(jnp.float32)
    yp = y_pred.astype(jnp.float32)
    return jnp.mean((yt - yp) ** 2 / (yt ** 2 + epsilon))


if __name__ == "__main__":
    key = jax.random.PRNGKey(0)
    k1, k2 = jax.random.split(key)
    # NCHW-shaped example inputs (batch=2, channels=4, spatial=16x16)
    y_true = jax.random.normal(k1, (2, 4, 16, 16), dtype=jnp.float32)
    y_pred = y_true + 0.1 * jax.random.normal(k2, (2, 4, 16, 16),
                                              dtype=jnp.float32)

    out = elementwise_normalized_mse_loss(y_true, y_pred)
    out = jax.block_until_ready(out)

    ref = _reference(y_true, y_pred)
    assert jnp.allclose(out, ref, rtol=1e-5, atol=1e-6), (out, ref)
    print("KERNEL_OK")
</pallas_src>

<mosaic_0001>
module attributes {stable_mosaic.version = 11 : i64} {
  func.func @_nmse_kernel(%arg0: i32, %arg1: memref<16x128xf32, #tpu.memory_space<vmem>>, %arg2: memref<16x128xf32, #tpu.memory_space<vmem>>, %arg3: memref<1x8x128xf32, #tpu.memory_space<vmem>>) attributes {dimension_semantics = [#tpu.dimension_semantics<parallel>], iteration_bounds = array<i64: 1>, scalar_prefetch = 0 : i64, scratch_operands = 0 : i64, tpu.core_type = #tpu.core_type<tc>, window_params = [{transform_indices = @transform_0, window_bounds = array<i64: 16, 128>}, {transform_indices = @transform_1, window_bounds = array<i64: 16, 128>}, {transform_indices = @transform_2, window_bounds = array<i64: 1, 8, 128>}]} {
    %c0 = arith.constant 0 : index
    %c0_0 = arith.constant 0 : index
    %0 = vector.load %arg1[%c0, %c0_0] : memref<16x128xf32, #tpu.memory_space<vmem>>, vector<16x128xf32>
    %c0_1 = arith.constant 0 : index
    %c0_2 = arith.constant 0 : index
    %1 = vector.load %arg2[%c0_1, %c0_2] : memref<16x128xf32, #tpu.memory_space<vmem>>, vector<16x128xf32>
    %2 = arith.subf %0, %1 : vector<16x128xf32>
    %3 = arith.mulf %2, %2 : vector<16x128xf32>
    %4 = arith.mulf %0, %0 : vector<16x128xf32>
    %cst = arith.constant 9.99999993E-9 : f32
    %5 = vector.broadcast %cst : f32 to vector<16x128xf32>
    %6 = arith.addf %4, %5 : vector<16x128xf32>
    %7 = tpu.reciprocal %6 : vector<16x128xf32> -> vector<16x128xf32>
    %8 = arith.mulf %3, %7 : vector<16x128xf32>
    %9 = vector.shape_cast %8 : vector<16x128xf32> to vector<2x8x128xf32>
    %cst_3 = arith.constant dense<0.000000e+00> : vector<8x128xf32>
    %10 = vector.multi_reduction <add>, %9, %cst_3 [0] : vector<2x8x128xf32> to vector<8x128xf32>
    %11 = vector.shape_cast %10 : vector<8x128xf32> to vector<1x8x128xf32>
    %c0_4 = arith.constant 0 : index
    %c0_5 = arith.constant 0 : index
    %c0_6 = arith.constant 0 : index
    %12 = vector.load %arg3[%c0_4, %c0_5, %c0_6] : memref<1x8x128xf32, #tpu.memory_space<vmem>>, vector<1x8x128xf32>
    tpu.vector_store %arg3[%c0_4, %c0_5, %c0_6], %11 {strides = array<i32>} : memref<1x8x128xf32, #tpu.memory_space<vmem>>, vector<1x8x128xf32>,
    return
  }
  func.func @transform_0(%arg0: i32) -> (i32, i32) {
    %c0_i32 = arith.constant 0 : i32
    %c0_i32_0 = arith.constant 0 : i32
    return %arg0, %c0_i32 : i32, i32
  }
  func.func @transform_1(%arg0: i32) -> (i32, i32) {
    %c0_i32 = arith.constant 0 : i32
    %c0_i32_0 = arith.constant 0 : i32
    return %arg0, %c0_i32 : i32, i32
  }
  func.func @transform_2(%arg0: i32) -> (i32, i32, i32) {
    %c0_i32 = arith.constant 0 : i32
    %c0_i32_0 = arith.constant 0 : i32
    %c0_i32_1 = arith.constant 0 : i32
    return %arg0, %c0_i32, %c0_i32_0 : i32, i32, i32
  }
}

</mosaic_0001>

<llo_original>
// kernel: tpu_custom_call.1
$region0: #{tpu_custom_call.1}
  #allocation0 [shape = 'u32[]', space=smem, size = 0x4, offset = 0x4, fixed_abs, tag = 'smem constant byte address 0x4 - core index']
  #allocation1 [shape = 'u32[72,128]{1,0:T(1,128)}', space=vmem, size = 0x9000, scoped, tag = 'internal scratch']
  %s0 = inlined_call_operand.hbm [shape: f32[16,128], index: 0, kind: input, shape index: {}]
  %s1 = inlined_call_operand.hbm [shape: f32[16,128], index: 1, kind: input, shape index: {}]
  %s2 = inlined_call_operand.hbm [shape: f32[1,8,128], index: 2, kind: output, shape index: {}]
  %s3 = sld [smem:[#allocation0]]
  $region26: #{tpu_custom_call.1} parent=0
    _
  %s5 = ssub.s32 1, %s3
  %s6 = scalar_select 0, %s5, %s3
  $region1: #{tpu_custom_call.1} parent=0
    #allocation2 [shape = 'u8[8192]{0}', space=vmem, size = 0x2000, scoped, tag = 'input window, operand 0, single buffered']
    #allocation3 [shape = 's32[1]{0}', space=sflag, size = 0x4, scoped, tag = 'scoped memory for tpu_custom_call.1']
    #allocation4 [shape = 's32[1]{0}', space=sflag, size = 0x4, scoped, tag = 'scoped memory for tpu_custom_call.1']
    #allocation5 [shape = 'u8[8192]{0}', space=vmem, size = 0x2000, scoped, tag = 'input window, operand 1, single buffered']
    #allocation6 [shape = 's32[1]{0}', space=sflag, size = 0x4, scoped, tag = 'scoped memory for tpu_custom_call.1']
    #allocation7 [shape = 'u8[4096]{0}', space=vmem, size = 0x1000, scoped, tag = 'output window, operand 0, single buffered']
    %7 = vsyncpa [#allocation3], 0
    %8 = vsyncpa [#allocation6], 0
    %9 = vsyncpa [#allocation4], 0
    // Predicated region
    $region2: #{tpu_custom_call.1} parent=1 // pred_check
      _
    $region3: #{tpu_custom_call.1} parent=1 // pred_check_branch
      %11 = sbr.rel (0) target = $region5
    $region4: #{tpu_custom_call.1} parent=1 // pred_region
      %13 = vsyncadd [#allocation3], 0
      %s14 = sshll.u32 %s0, 4
      %s15 = int_to_ptr.hbm [resolvable:$true] %s14
      %s16 = sshll.u32 [#allocation2], 4
      %s17 = int_to_ptr.vmem [resolvable:$true] %s16
      %22 = dma.hbm_to_vmem [thread:$0]  %s15, 256, %s17, [#allocation3], 128, 128, 8
    $region5: #{tpu_custom_call.1} parent=1 // pred_fallthru
      _
    // Predicated region
    $region6: #{tpu_custom_call.1} parent=1 // pred_check
      _
    $region7: #{tpu_custom_call.1} parent=1 // pred_check_branch
      %24 = sbr.rel (0) target = $region9
    $region8: #{tpu_custom_call.1} parent=1 // pred_region
      %26 = vsyncadd [#allocation6], 0
      %s27 = sshll.u32 %s1, 4
      %s28 = int_to_ptr.hbm [resolvable:$true] %s27
      %s29 = sshll.u32 [#allocation5], 4
      %s30 = int_to_ptr.vmem [resolvable:$true] %s29
      %35 = dma.hbm_to_vmem [thread:$0]  %s28, 256, %s30, [#allocation6], 128, 128, 8
    $region9: #{tpu_custom_call.1} parent=1 // pred_fallthru
      _
    // Predicated region
    $region10: #{tpu_custom_call.1} parent=1 // pred_check
      _
    $region11: #{tpu_custom_call.1} parent=1 // pred_check_branch
      %37 = sbr.rel (0) target = $region13
    $region12: #{tpu_custom_call.1} parent=1 // pred_region
      %39 = dma.done [#allocation3], 256
    $region13: #{tpu_custom_call.1} parent=1 // pred_fallthru
      _
    // Predicated region
    $region14: #{tpu_custom_call.1} parent=1 // pred_check
      _
    $region15: #{tpu_custom_call.1} parent=1 // pred_check_branch
      %41 = sbr.rel (0) target = $region17
    $region16: #{tpu_custom_call.1} parent=1 // pred_region
      %43 = dma.done [#allocation6], 256
    $region17: #{tpu_custom_call.1} parent=1 // pred_fallthru
      _
    %v44 = vld [vmem:[#allocation2] sm:$0xff]
    %v45 = vld [vmem:[#allocation2 + $0x8] sm:$0xff]
    %v46 = vld [vmem:[#allocation5] sm:$0xff]
    %v47 = vld [vmem:[#allocation5 + $0x8] sm:$0xff]
    %v48 = vsub.f32 %v44, %v46
    %v49 = vsub.f32 %v45, %v47
    %v50 = vmul.f32 %v48, %v48
    %v51 = vmul.f32 %v49, %v49
    %v52 = vmul.f32 %v44, %v44
    %v53 = vmul.f32 %v45, %v45
    %v54 = vadd.f32 %v52, 1e-08
    %v55 = vadd.f32 %v53, 1e-08
    %v56 = vrcp.pop %v54
    %v57 = vmul.f32 %v54, %v56
    %v58 = vsub.f32 1.0, %v57
    %v59 = vmul.f32 %v56, %v58
    %v60 = vadd.f32 %v56, %v59
    %vm61 = vweird.f32 %v54
    %vm62 = vweird.f32 %v56
    %vm63 = vmor %vm61, %vm62
    %v64 = vsel %vm63, %v56, %v60
    %v65 = vand.u32 2147483647, %v54
    %vm66 = vcmp.eq.f32.partialorder %v65, 8.507059e+37
    %v67 = vand.u32 %v54, 2147483648
    %v68 = vor.u32 1.1754944e-38, %v67
    %v69 = vsel %vm66, %v68, %v64
    %v70 = vrcp.pop %v55
    %v71 = vmul.f32 %v55, %v70
    %v72 = vsub.f32 1.0, %v71
    %v73 = vmul.f32 %v70, %v72
    %v74 = vadd.f32 %v70, %v73
    %vm75 = vweird.f32 %v55
    %vm76 = vweird.f32 %v70
    %vm77 = vmor %vm75, %vm76
    %v78 = vsel %vm77, %v70, %v74
    %v79 = vand.u32 2147483647, %v55
    %vm80 = vcmp.eq.f32.partialorder %v79, 8.507059e+37
    %v81 = vand.u32 %v55, 2147483648
    %v82 = vor.u32 1.1754944e-38, %v81
    %v83 = vsel %vm80, %v82, %v78
    %v84 = vmul.f32 %v50, %v69
    %v85 = vmul.f32 %v51, %v83
    %v86 = vadd.f32 %v84, %v85
    %87 = vst [vmem:[#allocation7] sm:$0xff] %v86
    // Predicated region
    $region18: #{tpu_custom_call.1} parent=1 // pred_check
      _
    $region19: #{tpu_custom_call.1} parent=1 // pred_check_branch
      %89 = sbr.rel (0) target = $region21
    $region20: #{tpu_custom_call.1} parent=1 // pred_region
      %91 = vsyncadd [#allocation4], 0
      %s93 = sshll.u32 [#allocation7], 4
      %s94 = int_to_ptr.vmem [resolvable:$true] %s93
      %s95 = sshll.u32 %s2, 4
      %s96 = int_to_ptr.hbm [resolvable:$true] %s95
      %98 = dma.vmem_to_hbm [thread:$0]  %s94, 128, %s96, [#allocation4]
    $region21: #{tpu_custom_call.1} parent=1 // pred_fallthru
      _
    // Predicated region
    $region22: #{tpu_custom_call.1} parent=1 // pred_check
      _
    $region23: #{tpu_custom_call.1} parent=1 // pred_check_branch
      %100 = sbr.rel (0) target = $region25
    $region24: #{tpu_custom_call.1} parent=1 // pred_region
      %102 = dma.done [#allocation4], 128
    $region25: #{tpu_custom_call.1} parent=1 // pred_fallthru
      _
    %103 = vsyncpa [#allocation3], 1
    %104 = vsyncpa [#allocation6], 1
    %105 = vsyncpa [#allocation4], 1

</llo_original>
